<compile_context>
chip_gen: v5e
topology: v5e:2x2
jax: 0.10.0
libtpu: 0.0.40
codegen_flags: <defaults>
</compile_context>

<pallas_src>
import jax
import jax.numpy as jnp
from jax.experimental import pallas as pl
from jax.experimental.pallas import tpu as pltpu


def _soft_prompt_kernel(src_p_ref, tgt_p_ref, src_e_ref, tgt_e_ref,
                        src_o_ref, tgt_o_ref):
    """One (batch element, D-tile) step: write prompt rows then embedding rows."""
    P = src_p_ref.shape[0]
    # src path
    src_o_ref[:P, :] = src_p_ref[...].astype(src_o_ref.dtype)
    src_o_ref[P:, :] = src_e_ref[...].astype(src_o_ref.dtype)
    # tgt path (same grid step -> single launch for both outputs)
    tgt_o_ref[:P, :] = tgt_p_ref[...].astype(tgt_o_ref.dtype)
    tgt_o_ref[P:, :] = tgt_e_ref[...].astype(tgt_o_ref.dtype)


def _choose_tile_d(D, total_rows, itemsize, budget_bytes=16 * 1024 * 1024):
    """Largest lane-dense D tile such that ~8 live buffers (src/tgt x in/out x
    double-buffered) of (total_rows, tD) stay under `budget_bytes`."""
    if D % 128 != 0:
        # Small / irregular embedding dims (e.g. the D=32 test config): use the
        # full dim — allowed because the block equals the full array extent.
        return D
    td = budget_bytes // (8 * total_rows * itemsize)
    td = (td // 128) * 128
    return int(max(128, min(td, D)))


def soft_prompt_concat(src_prompt, tgt_prompt, src_emb, tgt_emb):
    """prompts: (P, D); embs: (B, S, D) -> two (B, P+S, D) outputs."""
    P, D = src_prompt.shape
    B, S, D2 = src_emb.shape
    assert D == D2, "embedding_dim mismatch between prompt and embeddings"
    assert tgt_prompt.shape == (P, D)
    assert tgt_emb.shape == (B, S, D)

    T = P + S
    out_dtype = src_emb.dtype
    itemsize = jnp.dtype(out_dtype).itemsize
    tD = _choose_tile_d(D, T, itemsize)
    n_d = pl.cdiv(D, tD)

    # Prompts: same block every batch step (broadcast over batch), tiled along D.
    prompt_spec = pl.BlockSpec((P, tD), lambda b, d: (0, d))
    # Embeddings / outputs: one batch element per step (squeezed), full seq,
    # lane-dense D tile.
    emb_spec = pl.BlockSpec((None, S, tD), lambda b, d: (b, 0, d))
    out_spec = pl.BlockSpec((None, T, tD), lambda b, d: (b, 0, d))

    out_shapes = (
        jax.ShapeDtypeStruct((B, T, D), out_dtype),
        jax.ShapeDtypeStruct((B, T, D), out_dtype),
    )

    return pl.pallas_call(
        _soft_prompt_kernel,
        out_shape=out_shapes,
        grid=(B, n_d),
        in_specs=[prompt_spec, prompt_spec, emb_spec, emb_spec],
        out_specs=(out_spec, out_spec),
        compiler_params=pltpu.CompilerParams(
            dimension_semantics=("parallel", "parallel"),
            vmem_limit_bytes=32 * 1024 * 1024,
        ),
    )(src_prompt, tgt_prompt, src_emb, tgt_emb)


class SoftPromptingLayer:
    """JAX/Pallas re-implementation of the PyTorch SoftPromptingLayer forward."""

    def __init__(self, prompt_length, embedding_dim, key):
        k1, k2 = jax.random.split(key)
        # torch.randn-style init (standard normal), deterministic via PRNGKey.
        self.src_soft_prompt = jax.random.normal(
            k1, (prompt_length, embedding_dim), dtype=jnp.float32)
        self.tgt_soft_prompt = jax.random.normal(
            k2, (prompt_length, embedding_dim), dtype=jnp.float32)

    def __call__(self, src_emb, tgt_emb):
        return soft_prompt_concat(
            self.src_soft_prompt, self.tgt_soft_prompt, src_emb, tgt_emb)


if __name__ == "__main__":
    key = jax.random.PRNGKey(0)
    k_params, k_src, k_tgt = jax.random.split(key, 3)

    batch = 2
    prompt_length = 8     # multiple of 8 -> sublane-aligned prompt/emb boundary
    seq_len = 8
    embedding_dim = 32

    layer = SoftPromptingLayer(prompt_length, embedding_dim, k_params)

    src_emb = jax.random.normal(
        k_src, (batch, seq_len, embedding_dim), dtype=jnp.float32)
    tgt_emb = jax.random.normal(
        k_tgt, (batch, seq_len, embedding_dim), dtype=jnp.float32)

    src_out, tgt_out = layer(src_emb, tgt_emb)
    jax.block_until_ready((src_out, tgt_out))

    # Plain-JAX reference: broadcast prompt over batch + concat along seq.
    src_ref = jnp.concatenate(
        [jnp.broadcast_to(layer.src_soft_prompt[None],
                          (batch, prompt_length, embedding_dim)), src_emb],
        axis=1)
    tgt_ref = jnp.concatenate(
        [jnp.broadcast_to(layer.tgt_soft_prompt[None],
                          (batch, prompt_length, embedding_dim)), tgt_emb],
        axis=1)

    assert src_out.shape == (batch, prompt_length + seq_len, embedding_dim)
    assert tgt_out.shape == (batch, prompt_length + seq_len, embedding_dim)
    assert src_out.dtype == src_emb.dtype and tgt_out.dtype == tgt_emb.dtype
    assert jnp.allclose(src_out, src_ref)
    assert jnp.allclose(tgt_out, tgt_ref)

    print("KERNEL_OK")
</pallas_src>

<mosaic_0001>
module attributes {stable_mosaic.version = 11 : i64} {
  func.func @_soft_prompt_kernel(%arg0: i32, %arg1: i32, %arg2: memref<8x32xf32, #tpu.memory_space<vmem>>, %arg3: memref<8x32xf32, #tpu.memory_space<vmem>>, %arg4: memref<1x8x32xf32, #tpu.memory_space<vmem>>, %arg5: memref<1x8x32xf32, #tpu.memory_space<vmem>>, %arg6: memref<1x16x32xf32, #tpu.memory_space<vmem>>, %arg7: memref<1x16x32xf32, #tpu.memory_space<vmem>>) attributes {dimension_semantics = [#tpu.dimension_semantics<parallel>, #tpu.dimension_semantics<parallel>], iteration_bounds = array<i64: 2, 1>, scalar_prefetch = 0 : i64, scratch_operands = 0 : i64, tpu.core_type = #tpu.core_type<tc>, window_params = [{transform_indices = @transform_0, window_bounds = array<i64: 8, 32>}, {transform_indices = @transform_1, window_bounds = array<i64: 8, 32>}, {transform_indices = @transform_2, window_bounds = array<i64: 1, 8, 32>}, {transform_indices = @transform_3, window_bounds = array<i64: 1, 8, 32>}, {transform_indices = @transform_4, window_bounds = array<i64: 1, 16, 32>}, {transform_indices = @transform_5, window_bounds = array<i64: 1, 16, 32>}]} {
    %c0 = arith.constant 0 : index
    %c0_0 = arith.constant 0 : index
    %0 = vector.load %arg2[%c0, %c0_0] : memref<8x32xf32, #tpu.memory_space<vmem>>, vector<8x32xf32>
    %c0_1 = arith.constant 0 : index
    %c0_2 = arith.constant 0 : index
    %c0_3 = arith.constant 0 : index
    %1 = vector.load %arg6[%c0_1, %c0_2, %c0_3] : memref<1x16x32xf32, #tpu.memory_space<vmem>>, vector<1x8x32xf32>
    %2 = vector.shape_cast %1 : vector<1x8x32xf32> to vector<8x32xf32>
    %3 = vector.shape_cast %0 : vector<8x32xf32> to vector<1x8x32xf32>
    tpu.vector_store %arg6[%c0_1, %c0_2, %c0_3], %3 {strides = array<i32>} : memref<1x16x32xf32, #tpu.memory_space<vmem>>, vector<1x8x32xf32>,
    %c0_4 = arith.constant 0 : index
    %c0_5 = arith.constant 0 : index
    %c0_6 = arith.constant 0 : index
    %4 = vector.load %arg4[%c0_4, %c0_5, %c0_6] : memref<1x8x32xf32, #tpu.memory_space<vmem>>, vector<1x8x32xf32>
    %5 = vector.shape_cast %4 : vector<1x8x32xf32> to vector<8x32xf32>
    %c0_7 = arith.constant 0 : index
    %c8 = arith.constant 8 : index
    %c0_8 = arith.constant 0 : index
    %6 = vector.load %arg6[%c0_7, %c8, %c0_8] : memref<1x16x32xf32, #tpu.memory_space<vmem>>, vector<1x8x32xf32>
    %7 = vector.shape_cast %6 : vector<1x8x32xf32> to vector<8x32xf32>
    %8 = vector.shape_cast %5 : vector<8x32xf32> to vector<1x8x32xf32>
    tpu.vector_store %arg6[%c0_7, %c8, %c0_8], %8 {strides = array<i32>} : memref<1x16x32xf32, #tpu.memory_space<vmem>>, vector<1x8x32xf32>,
    %c0_9 = arith.constant 0 : index
    %c0_10 = arith.constant 0 : index
    %9 = vector.load %arg3[%c0_9, %c0_10] : memref<8x32xf32, #tpu.memory_space<vmem>>, vector<8x32xf32>
    %c0_11 = arith.constant 0 : index
    %c0_12 = arith.constant 0 : index
    %c0_13 = arith.constant 0 : index
    %10 = vector.load %arg7[%c0_11, %c0_12, %c0_13] : memref<1x16x32xf32, #tpu.memory_space<vmem>>, vector<1x8x32xf32>
    %11 = vector.shape_cast %10 : vector<1x8x32xf32> to vector<8x32xf32>
    %12 = vector.shape_cast %9 : vector<8x32xf32> to vector<1x8x32xf32>
    tpu.vector_store %arg7[%c0_11, %c0_12, %c0_13], %12 {strides = array<i32>} : memref<1x16x32xf32, #tpu.memory_space<vmem>>, vector<1x8x32xf32>,
    %c0_14 = arith.constant 0 : index
    %c0_15 = arith.constant 0 : index
    %c0_16 = arith.constant 0 : index
    %13 = vector.load %arg5[%c0_14, %c0_15, %c0_16] : memref<1x8x32xf32, #tpu.memory_space<vmem>>, vector<1x8x32xf32>
    %14 = vector.shape_cast %13 : vector<1x8x32xf32> to vector<8x32xf32>
    %c0_17 = arith.constant 0 : index
    %c8_18 = arith.constant 8 : index
    %c0_19 = arith.constant 0 : index
    %15 = vector.load %arg7[%c0_17, %c8_18, %c0_19] : memref<1x16x32xf32, #tpu.memory_space<vmem>>, vector<1x8x32xf32>
    %16 = vector.shape_cast %15 : vector<1x8x32xf32> to vector<8x32xf32>
    %17 = vector.shape_cast %14 : vector<8x32xf32> to vector<1x8x32xf32>
    tpu.vector_store %arg7[%c0_17, %c8_18, %c0_19], %17 {strides = array<i32>} : memref<1x16x32xf32, #tpu.memory_space<vmem>>, vector<1x8x32xf32>,
    return
  }
  func.func @transform_0(%arg0: i32, %arg1: i32) -> (i32, i32) {
    %c0_i32 = arith.constant 0 : i32
    %c0_i32_0 = arith.constant 0 : i32
    return %c0_i32, %arg1 : i32, i32
  }
  func.func @transform_1(%arg0: i32, %arg1: i32) -> (i32, i32) {
    %c0_i32 = arith.constant 0 : i32
    %c0_i32_0 = arith.constant 0 : i32
    return %c0_i32, %arg1 : i32, i32
  }
  func.func @transform_2(%arg0: i32, %arg1: i32) -> (i32, i32, i32) {
    %c0_i32 = arith.constant 0 : i32
    %c0_i32_0 = arith.constant 0 : i32
    return %arg0, %c0_i32, %arg1 : i32, i32, i32
  }
  func.func @transform_3(%arg0: i32, %arg1: i32) -> (i32, i32, i32) {
    %c0_i32 = arith.constant 0 : i32
    %c0_i32_0 = arith.constant 0 : i32
    return %arg0, %c0_i32, %arg1 : i32, i32, i32
  }
  func.func @transform_4(%arg0: i32, %arg1: i32) -> (i32, i32, i32) {
    %c0_i32 = arith.constant 0 : i32
    %c0_i32_0 = arith.constant 0 : i32
    return %arg0, %c0_i32, %arg1 : i32, i32, i32
  }
  func.func @transform_5(%arg0: i32, %arg1: i32) -> (i32, i32, i32) {
    %c0_i32 = arith.constant 0 : i32
    %c0_i32_0 = arith.constant 0 : i32
    return %arg0, %c0_i32, %arg1 : i32, i32, i32
  }
}

</mosaic_0001>

<llo_original>
// kernel: tpu_custom_call.1
$region0: #{tpu_custom_call.1}
  #allocation0 [shape = 'u32[]', space=smem, size = 0x4, offset = 0x4, fixed_abs, tag = 'smem constant byte address 0x4 - core index']
  #allocation1 [shape = 'u32[72,128]{1,0:T(1,128)}', space=vmem, size = 0x9000, scoped, tag = 'internal scratch']
  %s0 = inlined_call_operand.hbm [shape: f32[8,32], index: 0, kind: input, shape index: {}]
  %s1 = inlined_call_operand.hbm [shape: f32[8,32], index: 1, kind: input, shape index: {}]
  %s2 = inlined_call_operand.hbm [shape: f32[2,8,32], index: 2, kind: input, shape index: {}]
  %s3 = inlined_call_operand.hbm [shape: f32[2,8,32], index: 3, kind: input, shape index: {}]
  %s4 = inlined_call_operand.hbm [shape: f32[2,16,32], index: 4, kind: output, shape index: {0}]
  %s5 = inlined_call_operand.hbm [shape: f32[2,16,32], index: 5, kind: output, shape index: {1}]
  %6 = xla_tuple %s4, %s5
  %s7 = sld [smem:[#allocation0]]
  $region73: #{tpu_custom_call.1} parent=0
    _
  %s9 = ssub.s32 1, %s7
  %s10 = scalar_select 0, %s9, %s7
  $region1: #{tpu_custom_call.1} parent=0
    #allocation2 [shape = 'u8[4096]{0}', space=vmem, size = 0x1000, scoped, tag = 'input window, operand 0, single buffered']
    #allocation3 [shape = 's32[2]{0}', space=sflag, size = 0x8, scoped, tag = 'scoped memory for tpu_custom_call.1']
    #allocation4 [shape = 's32[2]{0}', space=sflag, size = 0x8, scoped, tag = 'scoped memory for tpu_custom_call.1']
    #allocation5 [shape = 'u8[4096]{0}', space=vmem, size = 0x1000, scoped, tag = 'input window, operand 1, single buffered']
    #allocation6 [shape = 's32[1]{0}', space=sflag, size = 0x4, scoped, tag = 'scoped memory for tpu_custom_call.1']
    #allocation7 [shape = 'u8[8192]{0}', space=vmem, size = 0x2000, scoped, tag = 'input window, operand 2']
    #allocation8 [shape = 'u8[8192]{0}', space=vmem, size = 0x2000, scoped, tag = 'input window, operand 3']
    #allocation9 [shape = 'u8[16384]{0}', space=vmem, size = 0x4000, scoped, tag = 'output window, operand 0']
    #allocation10 [shape = 'u8[16384]{0}', space=vmem, size = 0x4000, scoped, tag = 'output window, operand 1']
    #allocation11 [shape = 's32[2]{0}', space=sflag, size = 0x8, scoped, tag = 'scoped memory for tpu_custom_call.1']
    %11 = vsyncpa [#allocation3], 0
    %12 = vsyncpa [#allocation6], 0
    %13 = vsyncpa [#allocation4], 0
    %s14 = scalar_lea.sflag [#allocation4], 1
    %15 = vsyncpa %s14, 0
    %16 = vsyncpa [#allocation11], 0
    %s17 = scalar_lea.sflag [#allocation11], 1
    %18 = vsyncpa %s17, 0
    loop: start=0, step=1, limit=4
    $region2: #{tpu_custom_call.1} parent=1 // loop_pre_header
      _
    $region3: #{tpu_custom_call.1} parent=1 // loop_header
      %s20 = sphi 0, %s24
      %p21 = scmp.ge.s32.totalorder %s20, 4
      %s27 = sphi 0, %s39
      %s28 = sphi 0, %s35
      %s29 = sphi 0, %s27
      %s30 = sphi 0, %s28
      %s31 = sphi 0, %s29
      %s32 = sphi 0, %s30
      %s42 = sphi 0, %s44
      %s45 = sphi 0, %s42
      %s46 = sphi 0, %s45
      %s62 = sphi 0, %s46
      %s68 = sphi 0, %s70
      %s71 = sphi 0, %s68
      %s72 = sphi 0, %s71
      %s88 = sphi 0, %s72
      %s96 = sphi 0, %s98
      %s99 = sphi 0, %s96
      %s100 = sphi 0, %s99
      %s116 = sphi 0, %s100
      %s124 = sphi 0, %s126
      %s127 = sphi 0, %s124
      %s128 = sphi 0, %s127
      %s144 = sphi 0, %s128
      %s152 = sphi 0, %s154
      %s155 = sphi 0, %s152
      %s156 = sphi 0, %s155
      %s172 = sphi 0, %s156
      %s180 = sphi 0, %s182
      %s183 = sphi 0, %s180
      %s184 = sphi 0, %s183
      %s200 = sphi 0, %s184
    $region4: #{tpu_custom_call.1} parent=1 // loop_header_branch
      %23 = sbr.rel (%p21) target = $region8
    $region5: #{tpu_custom_call.1} parent=1 // loop_body
      %s25 = ssub.s32 %s20, 1
      %s26 = ssub.s32 %s20, 2
      %s33 = sadd.s32 1, %s28
      %p34 = scmp.ge.s32.totalorder %s33, 1
      %s35 = scalar_select %p34, 0, %s33
      %s36 = sadd.s32 1, %s27
      %s37 = scalar_select %p34, %s36, %s27
      %p38 = scmp.ge.s32.totalorder %s37, 2
      %s39 = scalar_select %p38, 0, %s37
      %s40 = ssub.s32 %s28, %s35
      %p41 = scmp.eq.s32.totalorder %s40, 0
      %s43 = sadd.s32 %s42, 1
      %s44 = scalar_select %p41, %s42, %s43
      %p47 = pneg %p41
      %p48 = scmp.eq.s32.totalorder %s20, 1
      %p49 = por %p47, %p48
      %p50 = scmp.ne.s32.totalorder %s42, %s45
      %p51 = scmp.eq.s32.totalorder %s20, 0
      %p52 = por %p50, %p51
      %p53 = scmp.ne.s32.totalorder %s42, %s45
      %p54 = scmp.eq.s32.totalorder %s25, 1
      %p55 = por %p53, %p54
      %p56 = scmp.ne.s32.totalorder %s45, %s46
      %p57 = scmp.eq.s32.totalorder %s25, 0
      %p58 = por %p56, %p57
      %p59 = scmp.ne.s32.totalorder %s45, %s46
      %p60 = scmp.eq.s32.totalorder %s26, 1
      %p61 = por %p59, %p60
      %p63 = scmp.ne.s32.totalorder %s46, %s62
      %p64 = scmp.eq.s32.totalorder %s26, 0
      %p65 = por %p63, %p64
      %s66 = ssub.s32 %s28, %s35
      %p67 = scmp.eq.s32.totalorder %s66, 0
      %s69 = sadd.s32 %s68, 1
      %s70 = scalar_select %p67, %s68, %s69
      %p73 = pneg %p67
      %p74 = scmp.eq.s32.totalorder %s20, 1
      %p75 = por %p73, %p74
      %p76 = scmp.ne.s32.totalorder %s68, %s71
      %p77 = scmp.eq.s32.totalorder %s20, 0
      %p78 = por %p76, %p77
      %p79 = scmp.ne.s32.totalorder %s68, %s71
      %p80 = scmp.eq.s32.totalorder %s25, 1
      %p81 = por %p79, %p80
      %p82 = scmp.ne.s32.totalorder %s71, %s72
      %p83 = scmp.eq.s32.totalorder %s25, 0
      %p84 = por %p82, %p83
      %p85 = scmp.ne.s32.totalorder %s71, %s72
      %p86 = scmp.eq.s32.totalorder %s26, 1
      %p87 = por %p85, %p86
      %p89 = scmp.ne.s32.totalorder %s72, %s88
      %p90 = scmp.eq.s32.totalorder %s26, 0
      %p91 = por %p89, %p90
      %s92 = ssub.s32 %s27, %s39
      %s93 = ssub.s32 %s28, %s35
      %s94 = sor.u32 %s92, %s93
      %p95 = scmp.eq.s32.totalorder %s94, 0
      %s97 = sadd.s32 %s96, 1
      %s98 = scalar_select %p95, %s96, %s97
      %p101 = pneg %p95
      %p102 = scmp.eq.s32.totalorder %s20, 1
      %p103 = por %p101, %p102
      %p104 = scmp.ne.s32.totalorder %s96, %s99
      %p105 = scmp.eq.s32.totalorder %s20, 0
      %p106 = por %p104, %p105
      %p107 = scmp.ne.s32.totalorder %s96, %s99
      %p108 = scmp.eq.s32.totalorder %s25, 1
      %p109 = por %p107, %p108
      %p110 = scmp.ne.s32.totalorder %s99, %s100
      %p111 = scmp.eq.s32.totalorder %s25, 0
      %p112 = por %p110, %p111
      %p113 = scmp.ne.s32.totalorder %s99, %s100
      %p114 = scmp.eq.s32.totalorder %s26, 1
      %p115 = por %p113, %p114
      %p117 = scmp.ne.s32.totalorder %s100, %s116
      %p118 = scmp.eq.s32.totalorder %s26, 0
      %p119 = por %p117, %p118
      %s120 = ssub.s32 %s27, %s39
      %s121 = ssub.s32 %s28, %s35
      %s122 = sor.u32 %s120, %s121
      %p123 = scmp.eq.s32.totalorder %s122, 0
      %s125 = sadd.s32 %s124, 1
      %s126 = scalar_select %p123, %s124, %s125
      %p129 = pneg %p123
      %p130 = scmp.eq.s32.totalorder %s20, 1
      %p131 = por %p129, %p130
      %p132 = scmp.ne.s32.totalorder %s124, %s127
      %p133 = scmp.eq.s32.totalorder %s20, 0
      %p134 = por %p132, %p133
      %p135 = scmp.ne.s32.totalorder %s124, %s127
      %p136 = scmp.eq.s32.totalorder %s25, 1
      %p137 = por %p135, %p136
      %p138 = scmp.ne.s32.totalorder %s127, %s128
      %p139 = scmp.eq.s32.totalorder %s25, 0
      %p140 = por %p138, %p139
      %p141 = scmp.ne.s32.totalorder %s127, %s128
      %p142 = scmp.eq.s32.totalorder %s26, 1
      %p143 = por %p141, %p142
      %p145 = scmp.ne.s32.totalorder %s128, %s144
      %p146 = scmp.eq.s32.totalorder %s26, 0
      %p147 = por %p145, %p146
      %s148 = ssub.s32 %s27, %s39
      %s149 = ssub.s32 %s28, %s35
      %s150 = sor.u32 %s148, %s149
      %p151 = scmp.eq.s32.totalorder %s150, 0
      %s153 = sadd.s32 %s152, 1
      %s154 = scalar_select %p151, %s152, %s153
      %p157 = pneg %p151
      %p158 = scmp.eq.s32.totalorder %s20, 1
      %p159 = por %p157, %p158
      %p160 = scmp.ne.s32.totalorder %s152, %s155
      %p161 = scmp.eq.s32.totalorder %s20, 0
      %p162 = por %p160, %p161
      %p163 = scmp.ne.s32.totalorder %s152, %s155
      %p164 = scmp.eq.s32.totalorder %s25, 1
      %p165 = por %p163, %p164
      %p166 = scmp.ne.s32.totalorder %s155, %s156
      %p167 = scmp.eq.s32.totalorder %s25, 0
      %p168 = por %p166, %p167
      %p169 = scmp.ne.s32.totalorder %s155, %s156
      %p170 = scmp.eq.s32.totalorder %s26, 1
      %p171 = por %p169, %p170
      %p173 = scmp.ne.s32.totalorder %s156, %s172
      %p174 = scmp.eq.s32.totalorder %s26, 0
      %p175 = por %p173, %p174
      %s176 = ssub.s32 %s27, %s39
      %s177 = ssub.s32 %s28, %s35
      %s178 = sor.u32 %s176, %s177
      %p179 = scmp.eq.s32.totalorder %s178, 0
      %s181 = sadd.s32 %s180, 1
      %s182 = scalar_select %p179, %s180, %s181
      %p185 = pneg %p179
      %p186 = scmp.eq.s32.totalorder %s20, 1
      %p187 = por %p185, %p186
      %p188 = scmp.ne.s32.totalorder %s180, %s183
      %p189 = scmp.eq.s32.totalorder %s20, 0
      %p190 = por %p188, %p189
      %p191 = scmp.ne.s32.totalorder %s180, %s183
      %p192 = scmp.eq.s32.totalorder %s25, 1
      %p193 = por %p191, %p192
      %p194 = scmp.ne.s32.totalorder %s183, %s184
      %p195 = scmp.eq.s32.totalorder %s25, 0
      %p196 = por %p194, %p195
      %p197 = scmp.ne.s32.totalorder %s183, %s184
      %p198 = scmp.eq.s32.totalorder %s26, 1
      %p199 = por %p197, %p198
      %p201 = scmp.ne.s32.totalorder %s184, %s200
      %p202 = scmp.eq.s32.totalorder %s26, 0
      %p203 = por %p201, %p202
      %p204 = scmp.le.s32.totalorder 1, %s20
      %p205 = scmp.lt.s32.totalorder %s20, 3
      %p206 = pnand %p204, %p205
      %p207 = pneg %p206
      // Predicated region
      $region9: #{tpu_custom_call.1} parent=5 // pred_check
        _
      $region10: #{tpu_custom_call.1} parent=5 // pred_check_branch
        %209 = sbr.rel (%p206) target = $region12
      $region11: #{tpu_custom_call.1} parent=5 // pred_region
        %s210 = ssub.s32 %s20, 1
        // Predicated region
        $region13: #{tpu_custom_call.1} parent=11 // pred_check
          %p211 = pneg %p58
        $region14: #{tpu_custom_call.1} parent=11 // pred_check_branch
          %213 = sbr.rel (%p211) target = $region16
        $region15: #{tpu_custom_call.1} parent=11 // pred_region
          %215 = vsyncadd [#allocation3], 0
          %s216 = smul.addr %s30, 8
          %s217 = scalar_lea.hbm %s0, %s216
          %s219 = sshll.u32 %s217, 4
          %s220 = int_to_ptr.hbm [resolvable:$true] %s219
          %s221 = sshll.u32 [#allocation2], 4
          %s222 = int_to_ptr.vmem [resolvable:$true] %s221
          %224 = dma.hbm_to_vmem [thread:$0]  %s220, 128, %s222, [#allocation3]
        $region16: #{tpu_custom_call.1} parent=11 // pred_fallthru
          _
        // Predicated region
        $region17: #{tpu_custom_call.1} parent=11 // pred_check
          %p225 = pneg %p84
        $region18: #{tpu_custom_call.1} parent=11 // pred_check_branch
          %227 = sbr.rel (%p225) target = $region20
        $region19: #{tpu_custom_call.1} parent=11 // pred_region
          %229 = vsyncadd [#allocation6], 0
          %s230 = smul.addr %s30, 8
          %s231 = scalar_lea.hbm %s1, %s230
          %s233 = sshll.u32 %s231, 4
          %s234 = int_to_ptr.hbm [resolvable:$true] %s233
          %s235 = sshll.u32 [#allocation5], 4
          %s236 = int_to_ptr.vmem [resolvable:$true] %s235
          %238 = dma.hbm_to_vmem [thread:$0]  %s234, 128, %s236, [#allocation6]
        $region20: #{tpu_custom_call.1} parent=11 // pred_fallthru
          _
      $region12: #{tpu_custom_call.1} parent=5 // pred_fallthru
        _
      %p239 = scmp.lt.s32.totalorder %s20, 2
      // Predicated region
      $region21: #{tpu_custom_call.1} parent=5 // pred_check
        %p240 = pneg %p239
      $region22: #{tpu_custom_call.1} parent=5 // pred_check_branch
        %242 = sbr.rel (%p240) target = $region24
      $region23: #{tpu_custom_call.1} parent=5 // pred_region
        // Predicated region
        $region25: #{tpu_custom_call.1} parent=23 // pred_check
          %p243 = pneg %p106
        $region26: #{tpu_custom_call.1} parent=23 // pred_check_branch
          %245 = sbr.rel (%p243) target = $region28
        $region27: #{tpu_custom_call.1} parent=23 // pred_region
          %s246 = sand.u32 %s20, 1
          %s247 = scalar_lea.sflag [#allocation3], %s246
          %s248 = sand.u32 %s96, 1
          %s249 = smul.addr %s248, 8
          %s250 = scalar_lea.vmem [#allocation7], %s249
          %252 = vsyncadd %s247, 0
          %s253 = sadd.s32 %s28, %s27
          %s254 = smul.addr %s253, 8
          %s255 = scalar_lea.hbm %s2, %s254
          %s257 = sshll.u32 %s255, 4
          %s258 = int_to_ptr.hbm [resolvable:$true] %s257
          %s259 = sshll.u32 %s250, 4
          %s260 = int_to_ptr.vmem [resolvable:$true] %s259
          %262 = dma.hbm_to_vmem [thread:$0]  %s258, 128, %s260, %s247
        $region28: #{tpu_custom_call.1} parent=23 // pred_fallthru
          _
        // Predicated region
        $region29: #{tpu_custom_call.1} parent=23 // pred_check
          %p263 = pneg %p134
        $region30: #{tpu_custom_call.1} parent=23 // pred_check_branch
          %265 = sbr.rel (%p263) target = $region32
        $region31: #{tpu_custom_call.1} parent=23 // pred_region
          %s266 = sand.u32 %s20, 1
          %s267 = scalar_lea.sflag [#allocation3], %s266
          %s268 = sand.u32 %s124, 1
          %s269 = smul.addr %s268, 8
          %s270 = scalar_lea.vmem [#allocation8], %s269
          %272 = vsyncadd %s267, 0
          %s273 = sadd.s32 %s28, %s27
          %s274 = smul.addr %s273, 8
          %s275 = scalar_lea.hbm %s3, %s274
          %s277 = sshll.u32 %s275, 4
          %s278 = int_to_ptr.hbm [resolvable:$true] %s277
          %s279 = sshll.u32 %s270, 4
          %s280 = int_to_ptr.vmem [resolvable:$true] %s279
          %282 = dma.hbm_to_vmem [thread:$0]  %s278, 128, %s280, %s267
        $region32: #{tpu_custom_call.1} parent=23 // pred_fallthru
          _
      $region24: #{tpu_custom_call.1} parent=5 // pred_fallthru
        _
      %p283 = scmp.le.s32.totalorder 1, %s20
      %p284 = scmp.lt.s32.totalorder %s20, 3
      %p285 = pnand %p283, %p284
      %p286 = pneg %p285
      // Predicated region
      $region33: #{tpu_custom_call.1} parent=5 // pred_check
        _
      $region34: #{tpu_custom_call.1} parent=5 // pred_check_branch
        %288 = sbr.rel (%p285) target = $region36
      $region35: #{tpu_custom_call.1} parent=5 // pred_region
        %s289 = ssub.s32 %s20, 1
        // Predicated region
        $region37: #{tpu_custom_call.1} parent=35 // pred_check
          %p290 = pneg %p58
        $region38: #{tpu_custom_call.1} parent=35 // pred_check_branch
          %292 = sbr.rel (%p290) target = $region40
        $region39: #{tpu_custom_call.1} parent=35 // pred_region
          %294 = dma.done [#allocation3], 128
        $region40: #{tpu_custom_call.1} parent=35 // pred_fallthru
          _
        // Predicated region
        $region41: #{tpu_custom_call.1} parent=35 // pred_check
          %p295 = pneg %p84
        $region42: #{tpu_custom_call.1} parent=35 // pred_check_branch
          %297 = sbr.rel (%p295) target = $region44
        $region43: #{tpu_custom_call.1} parent=35 // pred_region
          %299 = dma.done [#allocation6], 128
        $region44: #{tpu_custom_call.1} parent=35 // pred_fallthru
          _
        %s300 = sand.u32 %s25, 1
        %s301 = scalar_lea.sflag [#allocation3], %s300
        %s302 = sand.u32 %s99, 1
        %s303 = smul.addr %s302, 8
        %s304 = scalar_lea.vmem [#allocation7], %s303
        // Predicated region
        $region45: #{tpu_custom_call.1} parent=35 // pred_check
          %p305 = pneg %p112
        $region46: #{tpu_custom_call.1} parent=35 // pred_check_branch
          %307 = sbr.rel (%p305) target = $region48
        $region47: #{tpu_custom_call.1} parent=35 // pred_region
          %309 = dma.done %s301, 128
        $region48: #{tpu_custom_call.1} parent=35 // pred_fallthru
          _
        %s310 = sand.u32 %s25, 1
        %s311 = scalar_lea.sflag [#allocation3], %s310
        %s312 = sand.u32 %s127, 1
        %s313 = smul.addr %s312, 8
        %s314 = scalar_lea.vmem [#allocation8], %s313
        // Predicated region
        $region49: #{tpu_custom_call.1} parent=35 // pred_check
          %p315 = pneg %p140
        $region50: #{tpu_custom_call.1} parent=35 // pred_check_branch
          %317 = sbr.rel (%p315) target = $region52
        $region51: #{tpu_custom_call.1} parent=35 // pred_region
          %319 = dma.done %s311, 128
        $region52: #{tpu_custom_call.1} parent=35 // pred_fallthru
          _
        %p320 = pneg %p58
        %p321 = pneg %p55
        %p322 = pneg %p84
        %p323 = pneg %p81
        %s324 = sand.u32 %s25, 1
        %s325 = scalar_lea.sflag [#allocation3], %s324
        %s326 = sand.u32 %s99, 1
        %s327 = smul.addr %s326, 8
        %s328 = scalar_lea.vmem [#allocation7], %s327
        %p329 = pneg %p112
        %p330 = pneg %p109
        %s331 = sand.u32 %s25, 1
        %s332 = scalar_lea.sflag [#allocation3], %s331
        %s333 = sand.u32 %s127, 1
        %s334 = smul.addr %s333, 8
        %s335 = scalar_lea.vmem [#allocation8], %s334
        %p336 = pneg %p140
        %p337 = pneg %p137
        %p338 = pneg %p168
        %p339 = pneg %p165
        %s340 = sand.u32 %s155, 1
        %s341 = scalar_lea.sflag [#allocation4], %s340
        %s342 = sand.u32 %s155, 1
        %s343 = smul.addr %s342, 16
        %s344 = scalar_lea.vmem [#allocation9], %s343
        %p345 = pneg %p196
        %p346 = pneg %p193
        %s347 = sand.u32 %s183, 1
        %s348 = scalar_lea.sflag [#allocation11], %s347
        %s349 = sand.u32 %s183, 1
        %s350 = smul.addr %s349, 16
        %s351 = scalar_lea.vmem [#allocation10], %s350
        %v352 = vld [vmem:[#allocation2] sm:$0xff]
        %vm353 = vcmask 261120
        %354 = vst.msk [vmem:[%s344] sm:$0xff] %vm353, %v352
        %v355 = vld [vmem:[%s304] sm:$0xff]
        %356 = vst.msk [vmem:[%s344 + $0x8] sm:$0xff] %vm353, %v355
        %v357 = vld [vmem:[#allocation5] sm:$0xff]
        %358 = vst.msk [vmem:[%s351] sm:$0xff] %vm353, %v357
        %v359 = vld [vmem:[%s314] sm:$0xff]
        %360 = vst.msk [vmem:[%s351 + $0x8] sm:$0xff] %vm353, %v359
        %s361 = sand.u32 %s155, 1
        %s362 = scalar_lea.sflag [#allocation4], %s361
        %s363 = sand.u32 %s155, 1
        %s364 = smul.addr %s363, 16
        %s365 = scalar_lea.vmem [#allocation9], %s364
        %s366 = sand.u32 %s183, 1
        %s367 = scalar_lea.sflag [#allocation11], %s366
        %s368 = sand.u32 %s183, 1
        %s369 = smul.addr %s368, 16
        %s370 = scalar_lea.vmem [#allocation10], %s369
        // Predicated region
        $region53: #{tpu_custom_call.1} parent=35 // pred_check
          %p371 = pneg %p165
        $region54: #{tpu_custom_call.1} parent=35 // pred_check_branch
          %373 = sbr.rel (%p371) target = $region56
        $region55: #{tpu_custom_call.1} parent=35 // pred_region
          %375 = vsyncadd %s362, 0
          %s376 = smul.addr %s29, 2
          %s377 = sadd.s32 %s30, %s376
          %s378 = smul.addr %s377, 8
          %s379 = scalar_lea.hbm %s4, %s378
          %s380 = sshll.u32 %s365, 4
          %s381 = int_to_ptr.vmem [resolvable:$true] %s380
          %s382 = sshll.u32 %s379, 4
          %s383 = int_to_ptr.hbm [resolvable:$true] %s382
          %388 = dma.vmem_to_hbm [thread:$0]  %s381, 256, %s383, %s362, 128, 128, 8
        $region56: #{tpu_custom_call.1} parent=35 // pred_fallthru
          _
        // Predicated region
        $region57: #{tpu_custom_call.1} parent=35 // pred_check
          %p389 = pneg %p193
        $region58: #{tpu_custom_call.1} parent=35 // pred_check_branch
          %391 = sbr.rel (%p389) target = $region60
        $region59: #{tpu_custom_call.1} parent=35 // pred_region
          %393 = vsyncadd %s367, 0
          %s394 = smul.addr %s29, 2
          %s395 = sadd.s32 %s30, %s394
          %s396 = smul.addr %s395, 8
          %s397 = scalar_lea.hbm %s5, %s396
          %s398 = sshll.u32 %s370, 4
          %s399 = int_to_ptr.vmem [resolvable:$true] %s398
          %s400 = sshll.u32 %s397, 4
          %s401 = int_to_ptr.hbm [resolvable:$true] %s400
          %406 = dma.vmem_to_hbm [thread:$0]  %s399, 256, %s401, %s367, 128, 128, 8
        $region60: #{tpu_custom_call.1} parent=35 // pred_fallthru
          _
      $region36: #{tpu_custom_call.1} parent=5 // pred_fallthru
        _
      %p407 = scmp.le.s32.totalorder 2, %s20
      // Predicated region
      $region61: #{tpu_custom_call.1} parent=5 // pred_check
        %p408 = pneg %p407
      $region62: #{tpu_custom_call.1} parent=5 // pred_check_branch
        %410 = sbr.rel (%p408) target = $region64
      $region63: #{tpu_custom_call.1} parent=5 // pred_region
        %s411 = ssub.s32 %s20, 2
        // Predicated region
        $region65: #{tpu_custom_call.1} parent=63 // pred_check
          %p412 = pneg %p171
        $region66: #{tpu_custom_call.1} parent=63 // pred_check_branch
          %414 = sbr.rel (%p412) target = $region68
        $region67: #{tpu_custom_call.1} parent=63 // pred_region
          %s415 = sand.u32 %s156, 1
          %s416 = scalar_lea.sflag [#allocation4], %s415
          %s417 = sand.u32 %s156, 1
          %s418 = smul.addr %s417, 16
          %s419 = scalar_lea.vmem [#allocation9], %s418
          %421 = dma.done %s416, 256
        $region68: #{tpu_custom_call.1} parent=63 // pred_fallthru
          _
        // Predicated region
        $region69: #{tpu_custom_call.1} parent=63 // pred_check
          %p422 = pneg %p199
        $region70: #{tpu_custom_call.1} parent=63 // pred_check_branch
          %424 = sbr.rel (%p422) target = $region72
        $region71: #{tpu_custom_call.1} parent=63 // pred_region
          %s425 = sand.u32 %s184, 1
          %s426 = scalar_lea.sflag [#allocation11], %s425
          %s427 = sand.u32 %s184, 1
          %s428 = smul.addr %s427, 16
          %s429 = scalar_lea.vmem [#allocation10], %s428
          %431 = dma.done %s426, 256
        $region72: #{tpu_custom_call.1} parent=63 // pred_fallthru
          _
      $region64: #{tpu_custom_call.1} parent=5 // pred_fallthru
        _
    $region6: #{tpu_custom_call.1} parent=1 // loop_footer
      %s24 = sadd.s32 1, %s20
    $region7: #{tpu_custom_call.1} parent=1 // loop_footer_branch
      %19 = sbr.rel target = $region3
    $region8: #{tpu_custom_call.1} parent=1 // loop_exit
      _
    %432 = vsyncpa [#allocation3], 1
    %s433 = scalar_lea.sflag [#allocation3], 1
    %434 = vsyncpa %s433, 1
    %435 = vsyncpa [#allocation6], 1
    %436 = vsyncpa [#allocation4], 1
    %s437 = scalar_lea.sflag [#allocation4], 1
    %438 = vsyncpa %s437, 1
    %439 = vsyncpa [#allocation11], 1
    %s440 = scalar_lea.sflag [#allocation11], 1
    %441 = vsyncpa %s440, 1

</llo_original>
